<compile_context>
chip_gen: v5e
topology: v5e:2x2
jax: 0.10.0
libtpu: 0.0.40
codegen_flags: <defaults>
</compile_context>

<pallas_src>
import functools

import jax
import jax.numpy as jnp
from jax.experimental import pallas as pl
from jax.experimental.pallas import tpu as pltpu


def _attention_kernel(hb_ref, enc_ref, we_ref, v_ref, out_ref, *, ew_dtype):
    # hb_ref : (TB, D)      f32      hidden @ Wh^T + bias (hoisted in the wrapper)
    # enc_ref: (S, TB, E2)  f32/bf16 encoder outputs, seq-first (no HBM transpose)
    # we_ref : (E2, D)      f32/bf16 attn-weight^T columns multiplying enc outputs
    # v_ref  : (1, D)       f32      v weight as a lane-dense row
    # out_ref: (TB, S)      f32      softmax attention weights for this batch tile
    S, TB, E2 = enc_ref.shape
    D = hb_ref.shape[-1]

    # One MXU matmul with M = S*TB and f32 accumulation. The (S,TB,E2)->(S*TB,E2)
    # merge is a layout no-op because TB is a multiple of the sublane granularity.
    e_part = jnp.dot(enc_ref[...].reshape(S * TB, E2), we_ref[...],
                     preferred_element_type=jnp.float32)               # (S*TB, D)

    # Regroup rows (S*TB, D) -> (S, TB, D) and broadcast the hidden projection
    # (+bias) over src positions. The add stays in f32.
    pre = e_part.reshape(S, TB, D) + hb_ref[...][None, :, :]

    # tanh is the binding EUP op at moderate E2; ew_dtype=bf16 roughly doubles
    # its rate on v6e/v7x (keep f32 on v5e: no bf16 VPU/EUP there).
    energy = jnp.tanh(pre.astype(ew_dtype))

    # v(energy): VPU multiply + lane reduction with f32 accumulation; keeps the
    # MXU free and avoids an N=1 matmul.
    prod = (energy * v_ref[...].astype(ew_dtype)[None, :, :]).astype(jnp.float32)
    scores_sb = jnp.sum(prod, axis=-1)                                  # (S, TB)

    # Tiny XLU transpose so the softmax axis (src_len) lands on lanes and the
    # (TB, S) output block is legal (S = full lane extent) and dense.
    scores = scores_sb.T                                                # (TB, S)

    # Numerically-stable softmax over src_len (dim=1 of the PyTorch output).
    m = jnp.max(scores, axis=-1, keepdims=True)
    p = jnp.exp(scores - m)
    s = jnp.sum(p, axis=-1, keepdims=True)
    inv = pl.reciprocal(s, approx=True)          # EUP approximate reciprocal
    inv = inv * (2.0 - s * inv)                  # one Newton step -> ~f32 accuracy
    # TODO(synk): for S far below / not a multiple of 128, padding S to 128 with
    # -inf-masked scores would make this an unmasked lane-dense vst; skipped
    # because the output is tiny relative to the enc operand (modest win).
    out_ref[...] = p * inv


def _vmem_need_bytes(tb, S, E2, D, enc_bytes):
    """Estimated VMEM footprint for one batch tile (double-buffered blocks +
    in-kernel intermediates)."""
    enc_blk = 2 * S * tb * E2 * enc_bytes        # dominant streaming operand
    hb_blk = 2 * tb * D * 4
    out_blk = 2 * tb * S * 4
    weights = 2 * E2 * D * enc_bytes + 2 * 8 * max(D, 128) * 4   # We^T + v (tile-rounded)
    interm = 2 * S * tb * D * 4                  # e_part + energy live together
    return enc_blk + hb_blk + out_blk + weights + interm


def _pick_batch_tile(b_pad, S, E2, D, enc_bytes, g, budget_bytes, batch_tile):
    """VMEM-aware batch tile: largest multiple of the sublane granularity `g`
    that divides the (padded) batch and fits the byte budget; prefer >= 2 grid
    steps so v7x megacore gets both TensorCores."""
    if batch_tile is not None:
        assert batch_tile % g == 0 and b_pad % batch_tile == 0, \
            "batch_tile must be a multiple of the sublane granularity and divide the padded batch"
        return batch_tile, _vmem_need_bytes(batch_tile, S, E2, D, enc_bytes)

    cands = [c for c in range(g, b_pad + 1, g) if b_pad % c == 0]
    feasible = [c for c in cands if _vmem_need_bytes(c, S, E2, D, enc_bytes) <= budget_bytes]
    if not feasible:
        # TODO(synk): very large S*E2 also needs src/feature tiling (online
        # softmax); fall back to the smallest legal batch tile.
        tb = g
    else:
        tb = max(feasible)
        if b_pad // tb < 2:
            # Force >= 2 grid steps when possible so ("parallel",) shards batch
            # tiles across the two v7x TensorCores.
            split = [c for c in feasible if c <= b_pad // 2]
            if split:
                tb = max(split)
    return tb, _vmem_need_bytes(tb, S, E2, D, enc_bytes)


def attention_forward(hidden, encoder_outputs, attn_w, attn_b, v_w, *,
                      batch_tile=None, use_bf16_matmul=True, use_bf16_tanh=False,
                      vmem_budget_bytes=32 * 1024 * 1024):
    """hidden: [B, D]; encoder_outputs: [S, B, E2] (PyTorch seq-first layout).
    attn_w: [D, D + E2] (nn.Linear weight, out x in, cat order = hidden first);
    attn_b: [D]; v_w: [1, D].

    use_bf16_matmul: feed the MXU bf16 enc/We (valid on v5e/v6e/v7x: the MXU
    takes bf16 natively with f32 accumulation); halves HBM/VMEM of the big
    operand. use_bf16_tanh: run tanh / energy*v in bf16 (v6e/v7x only — keep
    False on v5e, which has no bf16 VPU/EUP). Returns [B, S] f32."""
    B, D = hidden.shape
    S, B2, E2 = encoder_outputs.shape
    assert B2 == B, "encoder_outputs must be [src_len, batch, enc_hid_dim*2]"

    enc_dtype = jnp.bfloat16 if use_bf16_matmul else jnp.float32
    enc_bytes = 2 if use_bf16_matmul else 4
    g = 16 if use_bf16_matmul else 8            # sublane granularity for legality + free reshapes

    # --- glue in plain JAX: weight split + hoisted hidden projection ---------
    # PyTorch cats (hidden, encoder_outputs) along features, so attn_w columns
    # [:D] multiply hidden and [D:] multiply encoder outputs.
    w_t = attn_w.T.astype(jnp.float32)           # [D + E2, D]
    wh_t = w_t[:D, :]
    we_t = w_t[D:, :]
    hb = hidden.astype(jnp.float32) @ wh_t + attn_b.astype(jnp.float32)   # [B, D]
    v_row = v_w.reshape(1, D).astype(jnp.float32)

    # Pad batch up to the sublane granularity so block shapes are legal and the
    # in-kernel (S,TB,E2)<->(S*TB,E2) reshapes are layout no-ops. Typical
    # training batches are already multiples of 8/16, so no HBM copy then.
    b_pad = -(-B // g) * g
    if b_pad != B:
        hb = jnp.pad(hb, ((0, b_pad - B), (0, 0)))
        encoder_outputs = jnp.pad(encoder_outputs, ((0, 0), (0, b_pad - B), (0, 0)))

    # Seq-first layout kept end-to-end: NO (1,0,2) full-HBM transpose of the
    # largest tensor; the BlockSpec below does a strided (S, TB, E2) DMA instead.
    enc = encoder_outputs.astype(enc_dtype)
    we_t = we_t.astype(enc_dtype)

    TB, vmem_need = _pick_batch_tile(b_pad, S, E2, D, enc_bytes, g,
                                     vmem_budget_bytes, batch_tile)
    vmem_limit = int(min(max(vmem_need * 13 // 10, 16 * 1024 * 1024),
                         48 * 1024 * 1024))

    kernel = functools.partial(
        _attention_kernel,
        ew_dtype=jnp.bfloat16 if use_bf16_tanh else jnp.float32)

    out = pl.pallas_call(
        kernel,
        out_shape=jax.ShapeDtypeStruct((b_pad, S), jnp.float32),
        grid_spec=pltpu.PrefetchScalarGridSpec(
            num_scalar_prefetch=0,
            grid=(b_pad // TB,),
            in_specs=[
                pl.BlockSpec((TB, D), lambda b: (b, 0)),         # hidden proj + bias
                pl.BlockSpec((S, TB, E2), lambda b: (0, b, 0)),  # enc, seq-first strided tile
                pl.BlockSpec((E2, D), lambda b: (0, 0)),         # We^T (grid-invariant)
                pl.BlockSpec((1, D), lambda b: (0, 0)),          # v row (grid-invariant)
            ],
            out_specs=pl.BlockSpec((TB, S), lambda b: (b, 0)),
        ),
        compiler_params=pltpu.CompilerParams(
            # Batch tiles are independent -> megacore sharding on v7x.
            dimension_semantics=("parallel",),
            vmem_limit_bytes=vmem_limit,
        ),
    )(hb, enc, we_t, v_row)

    return out[:B]


def _reference(hidden, encoder_outputs, attn_w, attn_b, v_w):
    """Pure-JAX reference mirroring the PyTorch forward exactly."""
    S = encoder_outputs.shape[0]
    h_rep = jnp.repeat(hidden[:, None, :], S, axis=1)          # [B, S, D]
    enc = jnp.transpose(encoder_outputs, (1, 0, 2))            # [B, S, E2]
    cat = jnp.concatenate([h_rep, enc], axis=2)                # [B, S, D+E2]
    energy = jnp.tanh(cat @ attn_w.T + attn_b)                 # [B, S, D]
    att = (energy @ v_w.T)[..., 0]                             # [B, S]
    return jax.nn.softmax(att, axis=1)


if __name__ == "__main__":
    # Small shapes consistent with the module.
    enc_hid_dim = 16
    dec_hid_dim = 32
    batch = 2
    src_len = 8
    E2 = enc_hid_dim * 2
    in_dim = E2 + dec_hid_dim

    key = jax.random.PRNGKey(0)
    k1, k2, k3, k4, k5 = jax.random.split(key, 5)

    # PyTorch-style uniform(-1/sqrt(fan_in), 1/sqrt(fan_in)) init.
    bound_attn = 1.0 / (in_dim ** 0.5)
    attn_w = jax.random.uniform(k1, (dec_hid_dim, in_dim), jnp.float32,
                                -bound_attn, bound_attn)
    attn_b = jax.random.uniform(k2, (dec_hid_dim,), jnp.float32,
                                -bound_attn, bound_attn)
    bound_v = 1.0 / (dec_hid_dim ** 0.5)
    v_w = jax.random.uniform(k3, (1, dec_hid_dim), jnp.float32, -bound_v, bound_v)

    # Inputs (PyTorch conventions: hidden [B, D]; encoder_outputs [S, B, 2*enc_hid]).
    hidden = jax.random.normal(k4, (batch, dec_hid_dim), jnp.float32)
    encoder_outputs = jax.random.normal(k5, (src_len, batch, E2), jnp.float32)

    ref = _reference(hidden, encoder_outputs, attn_w, attn_b, v_w)

    # Full-f32 path: tight check against the PyTorch-equivalent reference
    # (only deviation source is the approx-reciprocal + Newton step).
    out_f32 = attention_forward(hidden, encoder_outputs, attn_w, attn_b, v_w,
                                use_bf16_matmul=False)
    out_f32 = jax.block_until_ready(out_f32)
    assert out_f32.shape == (batch, src_len)
    assert jnp.allclose(jnp.sum(out_f32, axis=-1), 1.0, atol=1e-3)
    assert jnp.allclose(out_f32, ref, atol=1e-3, rtol=1e-3), "f32 kernel mismatch vs reference"

    # Default path: bf16 MXU operands (valid on all generations), f32
    # accumulation and f32 elementwise math; looser tolerance from bf16 inputs.
    out_bf16 = attention_forward(hidden, encoder_outputs, attn_w, attn_b, v_w)
    out_bf16 = jax.block_until_ready(out_bf16)
    assert out_bf16.shape == (batch, src_len)
    assert jnp.allclose(out_bf16, ref, atol=3e-2, rtol=3e-2), "bf16 kernel mismatch vs reference"

    print("KERNEL_OK")
</pallas_src>

<mosaic_0001>
module attributes {stable_mosaic.version = 11 : i64} {
  func.func @_attention_kernel(%arg0: i32, %arg1: memref<8x32xf32, #tpu.memory_space<vmem>>, %arg2: memref<8x8x32xf32, #tpu.memory_space<vmem>>, %arg3: memref<32x32xf32, #tpu.memory_space<vmem>>, %arg4: memref<1x32xf32, #tpu.memory_space<vmem>>, %arg5: memref<8x8xf32, #tpu.memory_space<vmem>>) attributes {dimension_semantics = [#tpu.dimension_semantics<parallel>], iteration_bounds = array<i64: 1>, scalar_prefetch = 0 : i64, scratch_operands = 0 : i64, tpu.core_type = #tpu.core_type<tc>, window_params = [{transform_indices = @transform_0, window_bounds = array<i64: 8, 32>}, {transform_indices = @transform_1, window_bounds = array<i64: 8, 8, 32>}, {pipeline_mode = #tpu.pipeline_mode<synchronous>, transform_indices = @transform_2, window_bounds = array<i64: 32, 32>}, {pipeline_mode = #tpu.pipeline_mode<synchronous>, transform_indices = @transform_3, window_bounds = array<i64: 1, 32>}, {transform_indices = @transform_4, window_bounds = array<i64: 8, 8>}]} {
    %c0 = arith.constant 0 : index
    %c0_0 = arith.constant 0 : index
    %c0_1 = arith.constant 0 : index
    %0 = vector.load %arg2[%c0, %c0_0, %c0_1] : memref<8x8x32xf32, #tpu.memory_space<vmem>>, vector<8x8x32xf32>
    %1 = vector.shape_cast %0 : vector<8x8x32xf32> to vector<64x32xf32>
    %c0_2 = arith.constant 0 : index
    %c0_3 = arith.constant 0 : index
    %2 = vector.load %arg3[%c0_2, %c0_3] : memref<32x32xf32, #tpu.memory_space<vmem>>, vector<32x32xf32>
    %cst = arith.constant dense<0.000000e+00> : vector<64x32xf32>
    %3 = tpu.matmul %1, %2, %cst {dimension_numbers = #tpu.dot_dimension_numbers<[1], [0], [0], [1], [0, 0, 1, 1], [], []>} : vector<64x32xf32>, vector<32x32xf32>, vector<64x32xf32> -> vector<64x32xf32>
    %4 = vector.shape_cast %3 : vector<64x32xf32> to vector<8x8x32xf32>
    %c0_4 = arith.constant 0 : index
    %c0_5 = arith.constant 0 : index
    %5 = vector.load %arg1[%c0_4, %c0_5] : memref<8x32xf32, #tpu.memory_space<vmem>>, vector<8x32xf32>
    %6 = vector.shape_cast %5 : vector<8x32xf32> to vector<1x8x32xf32>
    %7 = vector.broadcast %6 : vector<1x8x32xf32> to vector<8x8x32xf32>
    %8 = arith.addf %4, %7 : vector<8x8x32xf32>
    %9 = math.tanh %8 : vector<8x8x32xf32>
    %c0_6 = arith.constant 0 : index
    %c0_7 = arith.constant 0 : index
    %10 = vector.load %arg4[%c0_6, %c0_7] : memref<1x32xf32, #tpu.memory_space<vmem>>, vector<1x32xf32>
    %11 = vector.shape_cast %10 : vector<1x32xf32> to vector<1x1x32xf32>
    %12 = vector.broadcast %11 : vector<1x1x32xf32> to vector<8x8x32xf32>
    %13 = arith.mulf %9, %12 : vector<8x8x32xf32>
    %cst_8 = arith.constant dense<0.000000e+00> : vector<8x8xf32>
    %14 = vector.multi_reduction <add>, %13, %cst_8 [2] : vector<8x8x32xf32> to vector<8x8xf32>
    %15 = tpu.transpose %14, [1, 0] : vector<8x8xf32> -> vector<8x8xf32>
    %cst_9 = arith.constant dense<0xFF800000> : vector<8xf32>
    %16 = vector.multi_reduction <maximumf>, %15, %cst_9 [1] : vector<8x8xf32> to vector<8xf32>
    %17 = vector.shape_cast %16 : vector<8xf32> to vector<8x1xf32>
    %18 = vector.broadcast %17 : vector<8x1xf32> to vector<8x8xf32>
    %19 = arith.subf %15, %18 : vector<8x8xf32>
    %20 = math.exp %19 : vector<8x8xf32>
    %cst_10 = arith.constant dense<0.000000e+00> : vector<8xf32>
    %21 = vector.multi_reduction <add>, %20, %cst_10 [1] : vector<8x8xf32> to vector<8xf32>
    %22 = vector.shape_cast %21 : vector<8xf32> to vector<8x1xf32>
    %23 = tpu.reciprocal %22 {approx = true} : vector<8x1xf32> -> vector<8x1xf32>
    %24 = arith.mulf %22, %23 : vector<8x1xf32>
    %cst_11 = arith.constant 2.000000e+00 : f32
    %25 = vector.broadcast %cst_11 : f32 to vector<8x1xf32>
    %26 = arith.subf %25, %24 : vector<8x1xf32>
    %27 = arith.mulf %23, %26 : vector<8x1xf32>
    %28 = vector.broadcast %27 : vector<8x1xf32> to vector<8x8xf32>
    %29 = arith.mulf %20, %28 : vector<8x8xf32>
    %c0_12 = arith.constant 0 : index
    %c0_13 = arith.constant 0 : index
    %30 = vector.load %arg5[%c0_12, %c0_13] : memref<8x8xf32, #tpu.memory_space<vmem>>, vector<8x8xf32>
    tpu.vector_store %arg5[%c0_12, %c0_13], %29 {strides = array<i32>} : memref<8x8xf32, #tpu.memory_space<vmem>>, vector<8x8xf32>,
    return
  }
  func.func @transform_0(%arg0: i32) -> (i32, i32) {
    %c0_i32 = arith.constant 0 : i32
    %c0_i32_0 = arith.constant 0 : i32
    return %arg0, %c0_i32 : i32, i32
  }
  func.func @transform_1(%arg0: i32) -> (i32, i32, i32) {
    %c0_i32 = arith.constant 0 : i32
    %c0_i32_0 = arith.constant 0 : i32
    %c0_i32_1 = arith.constant 0 : i32
    return %c0_i32, %arg0, %c0_i32_0 : i32, i32, i32
  }
  func.func @transform_2(%arg0: i32) -> (i32, i32) {
    %c0_i32 = arith.constant 0 : i32
    %c0_i32_0 = arith.constant 0 : i32
    %c0_i32_1 = arith.constant 0 : i32
    return %c0_i32, %c0_i32_0 : i32, i32
  }
  func.func @transform_3(%arg0: i32) -> (i32, i32) {
    %c0_i32 = arith.constant 0 : i32
    %c0_i32_0 = arith.constant 0 : i32
    %c0_i32_1 = arith.constant 0 : i32
    return %c0_i32, %c0_i32_0 : i32, i32
  }
  func.func @transform_4(%arg0: i32) -> (i32, i32) {
    %c0_i32 = arith.constant 0 : i32
    %c0_i32_0 = arith.constant 0 : i32
    return %arg0, %c0_i32 : i32, i32
  }
}

</mosaic_0001>

<llo_original>
// kernel: tpu_custom_call.1
$region0: #{tpu_custom_call.1}
  #allocation0 [shape = 'u32[]', space=smem, size = 0x4, offset = 0x4, fixed_abs, tag = 'smem constant byte address 0x4 - core index']
  #allocation1 [shape = 'u32[72,128]{1,0:T(1,128)}', space=vmem, size = 0x9000, scoped, tag = 'internal scratch']
  %s0 = inlined_call_operand.hbm [shape: f32[8,32], index: 0, kind: input, shape index: {}]
  %s1 = inlined_call_operand.hbm [shape: f32[8,8,32], index: 1, kind: input, shape index: {}]
  %s2 = inlined_call_operand.hbm [shape: f32[32,32], index: 2, kind: input, shape index: {}]
  %s3 = inlined_call_operand.vmem [shape: f32[1,32], index: 3, kind: input, shape index: {}]
  %s4 = inlined_call_operand.hbm [shape: f32[8,8], index: 4, kind: output, shape index: {}]
  %s5 = sld [smem:[#allocation0]]
  $region38: #{tpu_custom_call.1} parent=0
    _
  %s7 = ssub.s32 1, %s5
  %s8 = scalar_select 0, %s7, %s5
  $region1: #{tpu_custom_call.1} parent=0
    #allocation2 [shape = 'u8[4096]{0}', space=vmem, size = 0x1000, scoped, tag = 'input window, operand 0, single buffered']
    #allocation3 [shape = 's32[1]{0}', space=sflag, size = 0x4, scoped, tag = 'scoped memory for tpu_custom_call.1']
    #allocation4 [shape = 's32[1]{0}', space=sflag, size = 0x4, scoped, tag = 'scoped memory for tpu_custom_call.1']
    #allocation5 [shape = 'u8[32768]{0}', space=vmem, size = 0x8000, scoped, tag = 'input window, operand 1, single buffered']
    #allocation6 [shape = 's32[1]{0}', space=sflag, size = 0x4, scoped, tag = 'scoped memory for tpu_custom_call.1']
    #allocation7 [shape = 'u8[16384]{0}', space=vmem, size = 0x4000, scoped, tag = 'input window, operand 2, single buffered']
    #allocation8 [shape = 'u8[4096]{0}', space=vmem, size = 0x1000, scoped, tag = 'output window, operand 0, single buffered']
    %9 = vsyncpa [#allocation3], 0
    %10 = vsyncpa [#allocation6], 0
    %11 = vsyncpa [#allocation4], 0
    // Predicated region
    $region2: #{tpu_custom_call.1} parent=1 // pred_check
      _
    $region3: #{tpu_custom_call.1} parent=1 // pred_check_branch
      %13 = sbr.rel (0) target = $region5
    $region4: #{tpu_custom_call.1} parent=1 // pred_region
      %15 = vsyncadd [#allocation3], 0
      %s17 = sshll.u32 %s0, 4
      %s18 = int_to_ptr.hbm [resolvable:$true] %s17
      %s19 = sshll.u32 [#allocation2], 4
      %s20 = int_to_ptr.vmem [resolvable:$true] %s19
      %22 = dma.hbm_to_vmem [thread:$0]  %s18, 128, %s20, [#allocation3]
    $region5: #{tpu_custom_call.1} parent=1 // pred_fallthru
      _
    // Predicated region
    $region6: #{tpu_custom_call.1} parent=1 // pred_check
      _
    $region7: #{tpu_custom_call.1} parent=1 // pred_check_branch
      %24 = sbr.rel (0) target = $region9
    $region8: #{tpu_custom_call.1} parent=1 // pred_region
      %26 = vsyncadd [#allocation6], 0
      %s27 = sshll.u32 %s1, 4
      %s28 = int_to_ptr.hbm [resolvable:$true] %s27
      %s29 = sshll.u32 [#allocation5], 4
      %s30 = int_to_ptr.vmem [resolvable:$true] %s29
      %35 = dma.hbm_to_vmem [thread:$0]  %s28, 1024, %s30, [#allocation6], 128, 128, 8
    $region9: #{tpu_custom_call.1} parent=1 // pred_fallthru
      _
    // Predicated region
    $region10: #{tpu_custom_call.1} parent=1 // pred_check
      _
    $region11: #{tpu_custom_call.1} parent=1 // pred_check_branch
      %37 = sbr.rel (0) target = $region13
    $region12: #{tpu_custom_call.1} parent=1 // pred_region
      %39 = vsyncadd [#allocation6], 0
      %s40 = sshll.u32 %s2, 4
      %s41 = int_to_ptr.hbm [resolvable:$true] %s40
      %s42 = sshll.u32 [#allocation7], 4
      %s43 = int_to_ptr.vmem [resolvable:$true] %s42
      %48 = dma.hbm_to_vmem [thread:$0]  %s41, 512, %s43, [#allocation6], 128, 128, 8
    $region13: #{tpu_custom_call.1} parent=1 // pred_fallthru
      _
    // Predicated region
    $region14: #{tpu_custom_call.1} parent=1 // pred_check
      _
    $region15: #{tpu_custom_call.1} parent=1 // pred_check_branch
      %50 = sbr.rel (0) target = $region17
    $region16: #{tpu_custom_call.1} parent=1 // pred_region
      _
    $region17: #{tpu_custom_call.1} parent=1 // pred_fallthru
      _
    // Predicated region
    $region18: #{tpu_custom_call.1} parent=1 // pred_check
      _
    $region19: #{tpu_custom_call.1} parent=1 // pred_check_branch
      %52 = sbr.rel (0) target = $region21
    $region20: #{tpu_custom_call.1} parent=1 // pred_region
      %54 = dma.done [#allocation3], 128
    $region21: #{tpu_custom_call.1} parent=1 // pred_fallthru
      _
    // Predicated region
    $region22: #{tpu_custom_call.1} parent=1 // pred_check
      _
    $region23: #{tpu_custom_call.1} parent=1 // pred_check_branch
      %56 = sbr.rel (0) target = $region25
    $region24: #{tpu_custom_call.1} parent=1 // pred_region
      %58 = dma.done [#allocation6], 1024
    $region25: #{tpu_custom_call.1} parent=1 // pred_fallthru
      _
    // Predicated region
    $region26: #{tpu_custom_call.1} parent=1 // pred_check
      _
    $region27: #{tpu_custom_call.1} parent=1 // pred_check_branch
      %60 = sbr.rel (0) target = $region29
    $region28: #{tpu_custom_call.1} parent=1 // pred_region
      %62 = dma.done [#allocation6], 512
    $region29: #{tpu_custom_call.1} parent=1 // pred_fallthru
      _
    %v63 = vld [vmem:[#allocation5] sm:$0xff]
    %v64 = vld [vmem:[#allocation5 + $0x8] sm:$0xff]
    %v65 = vld [vmem:[#allocation5 + $0x10] sm:$0xff]
    %v66 = vld [vmem:[#allocation5 + $0x18] sm:$0xff]
    %v67 = vld [vmem:[#allocation5 + $0x20] sm:$0xff]
    %v68 = vld [vmem:[#allocation5 + $0x28] sm:$0xff]
    %v69 = vld [vmem:[#allocation5 + $0x30] sm:$0xff]
    %v70 = vld [vmem:[#allocation5 + $0x38] sm:$0xff]
    %v71 = vld [vmem:[#allocation7] sm:$0xff]
    %v72 = vld [vmem:[#allocation7 + $0x8] sm:$0xff]
    %v73 = vld [vmem:[#allocation7 + $0x10] sm:$0xff]
    %v74 = vld [vmem:[#allocation7 + $0x18] sm:$0xff]
    %vm75 = vcmask 261120
    %v77 = vsel %vm75, %v63, 0
    %v80 = vsel %vm75, %v64, 0
    %v83 = vsel %vm75, %v65, 0
    %v86 = vsel %vm75, %v66, 0
    %v89 = vsel %vm75, %v67, 0
    %v92 = vsel %vm75, %v68, 0
    %v95 = vsel %vm75, %v69, 0
    %v98 = vsel %vm75, %v70, 0
    %100 = vmatpush.msra.mxu0 0.0
    %101 = vmatpush.msra.mxu0 0.0
    %102 = vmatpush.msra.mxu0 0.0
    %103 = vmatpush.msra.mxu0 0.0
    %104 = vmatpush.msra.mxu0 0.0
    %105 = vmatpush.msra.mxu0 0.0
    %106 = vmatpush.msra.mxu0 0.0
    %107 = vmatpush.msra.mxu0 0.0
    %108 = vmatpush.msra.mxu0 0.0
    %109 = vmatpush.msra.mxu0 0.0
    %110 = vmatpush.msra.mxu0 0.0
    %111 = vmatpush.msra.mxu0 0.0
    %112 = vmatpush.msra.mxu0 %v74
    %113 = vmatpush.msra.mxu0 %v73
    %114 = vmatpush.msra.mxu0 %v72
    %115 = vmatpush.msra.mxu0 %v71
    %116 = vmatmul.f32.gmra.mxu0 %v77
    %v117 = vpop.f32.mrf.mxu0
    %v118 = vadd.f32 0.0, %v117
    %119 = vmatmul.f32.gmra.mxu0 %v80
    %v120 = vpop.f32.mrf.mxu0
    %v121 = vadd.f32 0.0, %v120
    %122 = vmatmul.f32.gmra.mxu0 %v83
    %v123 = vpop.f32.mrf.mxu0
    %v124 = vadd.f32 0.0, %v123
    %125 = vmatmul.f32.gmra.mxu0 %v86
    %v126 = vpop.f32.mrf.mxu0
    %v127 = vadd.f32 0.0, %v126
    %128 = vmatmul.f32.gmra.mxu0 %v89
    %v129 = vpop.f32.mrf.mxu0
    %v130 = vadd.f32 0.0, %v129
    %131 = vmatmul.f32.gmra.mxu0 %v92
    %v132 = vpop.f32.mrf.mxu0
    %v133 = vadd.f32 0.0, %v132
    %134 = vmatmul.f32.gmra.mxu0 %v95
    %v135 = vpop.f32.mrf.mxu0
    %v136 = vadd.f32 0.0, %v135
    %137 = vmatmul.f32.gmra.mxu0 %v98
    %v138 = vpop.f32.mrf.mxu0
    %v139 = vadd.f32 0.0, %v138
    %140 = vdwg.mxu0
    %v141 = vld [vmem:[#allocation2] sm:$0xff]
    %v142 = vadd.f32 %v118, %v141
    %v143 = vadd.f32 %v121, %v141
    %v144 = vadd.f32 %v124, %v141
    %v145 = vadd.f32 %v127, %v141
    %v146 = vadd.f32 %v130, %v141
    %v147 = vadd.f32 %v133, %v141
    %v148 = vadd.f32 %v136, %v141
    %v149 = vadd.f32 %v139, %v141
    %v150 = vtanh.pop %v142
    %v151 = vtanh.pop %v143
    %v152 = vtanh.pop %v144
    %v153 = vtanh.pop %v145
    %v154 = vtanh.pop %v146
    %v155 = vtanh.pop %v147
    %v156 = vtanh.pop %v148
    %v157 = vtanh.pop %v149
    %v158 = vld [vmem:[%s3] sm:$0x1]
    %v160 = vperm.slane %v158, 0
    %v162 = vmul.f32 %v150, %v160
    %v163 = vmul.f32 %v151, %v160
    %v164 = vmul.f32 %v152, %v160
    %v165 = vmul.f32 %v153, %v160
    %v166 = vmul.f32 %v154, %v160
    %v167 = vmul.f32 %v155, %v160
    %v168 = vmul.f32 %v156, %v160
    %v169 = vmul.f32 %v157, %v160
    %v170 = vsel %vm75, %v162, 0.0
    %171 = vadd.xlane.f32.xlu0 %v170
    %v172 = vpop.xlane.xlu0 %171
    %v173 = vsel %vm75, %v163, 0.0
    %174 = vadd.xlane.f32.xlu0 %v173
    %v175 = vpop.xlane.xlu0 %174
    %v176 = vsel %vm75, %v164, 0.0
    %177 = vadd.xlane.f32.xlu0 %v176
    %v178 = vpop.xlane.xlu0 %177
    %v179 = vsel %vm75, %v165, 0.0
    %180 = vadd.xlane.f32.xlu0 %v179
    %v181 = vpop.xlane.xlu0 %180
    %v182 = vsel %vm75, %v166, 0.0
    %183 = vadd.xlane.f32.xlu0 %v182
    %v184 = vpop.xlane.xlu0 %183
    %v185 = vsel %vm75, %v167, 0.0
    %186 = vadd.xlane.f32.xlu0 %v185
    %v187 = vpop.xlane.xlu0 %186
    %v188 = vsel %vm75, %v168, 0.0
    %189 = vadd.xlane.f32.xlu0 %v188
    %v190 = vpop.xlane.xlu0 %189
    %v191 = vsel %vm75, %v169, 0.0
    %192 = vadd.xlane.f32.xlu0 %v191
    %v193 = vpop.xlane.xlu0 %192
    %v202 = vlaneseq
    %v203 = vand.u32 %v202, 127
    %v204 = vperm.slane %v172, %v203
    %v205 = vperm.slane %v175, %v203
    %v206 = vperm.slane %v178, %v203
    %v207 = vperm.slane %v181, %v203
    %v208 = vperm.slane %v184, %v203
    %v209 = vperm.slane %v187, %v203
    %v210 = vperm.slane %v190, %v203
    %v211 = vperm.slane %v193, %v203
    %vm212 = vcmask 1041409
    %v213 = vsel %vm212, %v205, %v204
    %vm214 = vcmask 1042434
    %v215 = vsel %vm214, %v206, %v213
    %vm216 = vcmask 1043459
    %v217 = vsel %vm216, %v207, %v215
    %vm218 = vcmask 1044484
    %v219 = vsel %vm218, %v208, %v217
    %vm220 = vcmask 1045509
    %v221 = vsel %vm220, %v209, %v219
    %vm222 = vcmask 1046534
    %v223 = vsel %vm222, %v210, %v221
    %vm224 = vcmask 1047559
    %v225 = vsel %vm224, %v211, %v223
    %227 = vxpose.xlu0.b32.start [1/16] %v225, 128
    %228 = vxpose.xlu0.b32.cont [2/16] 0.0, 128
    %229 = vxpose.xlu0.b32.cont [3/16] 0.0, 128
    %230 = vxpose.xlu0.b32.cont [4/16] 0.0, 128
    %231 = vxpose.xlu0.b32.cont [5/16] 0.0, 128
    %232 = vxpose.xlu0.b32.cont [6/16] 0.0, 128
    %233 = vxpose.xlu0.b32.cont [7/16] 0.0, 128
    %234 = vxpose.xlu0.b32.cont [8/16] 0.0, 128
    %235 = vxpose.xlu0.b32.cont [9/16] 0.0, 128
    %236 = vxpose.xlu0.b32.cont [10/16] 0.0, 128
    %237 = vxpose.xlu0.b32.cont [11/16] 0.0, 128
    %238 = vxpose.xlu0.b32.cont [12/16] 0.0, 128
    %239 = vxpose.xlu0.b32.cont [13/16] 0.0, 128
    %240 = vxpose.xlu0.b32.cont [14/16] 0.0, 128
    %241 = vxpose.xlu0.b32.cont [15/16] 0.0, 128
    %242 = vxpose.xlu0.b32.end [16/16] 0.0, 128
    %v243 = vpop.trf.xlu0
    %v244 = vpop.trf.xlu0
    %v245 = vpop.trf.xlu0
    %v246 = vpop.trf.xlu0
    %v247 = vpop.trf.xlu0
    %v248 = vpop.trf.xlu0
    %v249 = vpop.trf.xlu0
    %v250 = vpop.trf.xlu0
    %v251 = vpop.trf.xlu0
    %v252 = vpop.trf.xlu0
    %v253 = vpop.trf.xlu0
    %v254 = vpop.trf.xlu0
    %v255 = vpop.trf.xlu0
    %v256 = vpop.trf.xlu0
    %v257 = vpop.trf.xlu0
    %v258 = vpop.trf.xlu0
    %vm259 = vcmask 64512
    %v260 = vsel %vm259, %v243, -inf
    %261 = vmax.xlane.f32.xlu0 %v260
    %v262 = vpop.xlane.xlu0 %261
    %v263 = vsub.f32 %v243, %v262
    %v264 = vmul.f32 %v263, 1.442695
    %v265 = vpow.pop %v264
    %v266 = vsel %vm259, %v265, 0.0
    %267 = vadd.xlane.f32.xlu0 %v266
    %v268 = vpop.xlane.xlu0 %267
    %v269 = vrcp.pop %v268
    %v270 = vmul.f32 %v268, %v269
    %v271 = vsub.f32 2.0, %v270
    %v272 = vmul.f32 %v269, %v271
    %v273 = vmul.f32 %v265, %v272
    %274 = vst.msk [vmem:[#allocation8] sm:$0xff] %vm259, %v273
    // Predicated region
    $region30: #{tpu_custom_call.1} parent=1 // pred_check
      _
    $region31: #{tpu_custom_call.1} parent=1 // pred_check_branch
      %276 = sbr.rel (0) target = $region33
    $region32: #{tpu_custom_call.1} parent=1 // pred_region
      %278 = vsyncadd [#allocation4], 0
      %s280 = sshll.u32 [#allocation8], 4
      %s281 = int_to_ptr.vmem [resolvable:$true] %s280
      %s282 = sshll.u32 %s4, 4
      %s283 = int_to_ptr.hbm [resolvable:$true] %s282
      %285 = dma.vmem_to_hbm [thread:$0]  %s281, 128, %s283, [#allocation4]
    $region33: #{tpu_custom_call.1} parent=1 // pred_fallthru
      _
    // Predicated region
    $region34: #{tpu_custom_call.1} parent=1 // pred_check
      _
    $region35: #{tpu_custom_call.1} parent=1 // pred_check_branch
      %287 = sbr.rel (0) target = $region37
    $region36: #{tpu_custom_call.1} parent=1 // pred_region
      %289 = dma.done [#allocation4], 128
    $region37: #{tpu_custom_call.1} parent=1 // pred_fallthru
      _
    %290 = vsyncpa [#allocation3], 1
    %291 = vsyncpa [#allocation6], 1
    %292 = vsyncpa [#allocation4], 1

</llo_original>
